<compile_context>
chip_gen: v6e
topology: v6e:2x2x1
jax: 0.10.0
libtpu: 0.0.40
codegen_flags: <defaults>
</compile_context>

<pallas_src>
import functools

import jax
import jax.numpy as jnp
from jax.experimental import pallas as pl
from jax.experimental.pallas import tpu as pltpu


def _round_up(v, m):
    return (v + m - 1) // m * m


def _pick_feature_tile(dim, candidates=(1024, 512, 384, 256, 128), waste_limit=1.10):
    """Largest lane-dense (multiple-of-128) tile whose pad waste on `dim` is small."""
    for t in candidates:
        if _round_up(dim, t) <= waste_limit * dim:
            return t
    return candidates[-1]


# --------------------------------------------------------------------------- #
# Kernel: one (i, j, k) grid step of  out = x @ w + b  with f32 accumulation.  #
# --------------------------------------------------------------------------- #
def _matmul_bias_kernel(x_ref, w_ref, b_ref, o_ref, acc_ref):
    k = pl.program_id(2)

    @pl.when(k == 0)
    def _():
        # Fold the bias into the accumulator init; the epilogue is a pure cast+store.
        acc_ref[...] = jnp.broadcast_to(b_ref[...], acc_ref.shape)

    acc_ref[...] += jnp.dot(
        x_ref[...], w_ref[...], preferred_element_type=jnp.float32
    )

    @pl.when(k == pl.num_programs(2) - 1)
    def _():
        o_ref[...] = acc_ref[...].astype(o_ref.dtype)


def prepare_sum_params(w_stack, b_stack, param_dtype=jnp.bfloat16):
    """Fold SumModules' per-module nn.Linear params into one padded (W^T, b).

    w_stack: (M, H_out, H_in)  (PyTorch nn.Linear weight layout)
    b_stack: (M, H_out)

    Done ONCE at module-init time: the reduction over modules (in f32), the
    transpose, the cast to the compute dtype and the zero-padding to tile
    multiples are hoisted out of the forward path (no per-call HBM round-trip
    of the weights).
    """
    _, H_out, H_in = w_stack.shape
    w_sum_t = jnp.sum(w_stack.astype(jnp.float32), axis=0).T      # (H_in, H_out)
    b_sum = jnp.sum(b_stack.astype(jnp.float32), axis=0)          # (H_out,)

    tn = _pick_feature_tile(H_out)
    tk = _pick_feature_tile(H_in)
    pad_N = _round_up(H_out, tn)
    pad_K = _round_up(H_in, tk)

    w_p = (
        jnp.zeros((pad_K, pad_N), param_dtype)
        .at[:H_in, :H_out]
        .set(w_sum_t.astype(param_dtype))
    )
    b_p = jnp.zeros((1, pad_N), jnp.float32).at[0, :H_out].set(b_sum)

    meta = dict(h_in=int(H_in), h_out=int(H_out), tn=int(tn), tk=int(tk))
    return w_p, b_p, meta


def _sum_linear_forward(x, w_p, b_p, *, h_in, h_out, tn, tk, weight_buffers=2):
    """y[B, H_out] = x[B, H_in] @ w_p[:H_in, :H_out] + b_p[0, :H_out]  (f32 output)."""
    B, x_h_in = x.shape
    assert x_h_in == h_in, "input feature size mismatch"
    pad_K, pad_N = w_p.shape

    compute_dtype = w_p.dtype              # derive compute dtype from prepared weights
    itemsize = jnp.dtype(compute_dtype).itemsize

    # Small-shape fast path: pad waste + pallas_call overhead dominate at these
    # sizes; XLA's fused dot is strictly better.
    if B < 8 or h_in < 128 or h_out < 128 or (h_in * h_out) < 256 * 256:
        y = jnp.dot(
            x.astype(compute_dtype),
            w_p[:h_in, :h_out],
            preferred_element_type=jnp.float32,
        )
        return y + b_p[0, :h_out]

    # ---- Batch-dependent tiling (feature tiles tn/tk were fixed at prep time;
    # ---- any shrink below keeps them divisors of pad_N / pad_K).
    sublane = {4: 8, 2: 16, 1: 32}.get(itemsize, 8)   # dtype-native sublane packing
    tm = min(512, _round_up(B, sublane))
    pad_B = _round_up(B, tm)

    tn_eff, tk_eff = tn, tk

    # v7x has 2 TensorCores: guarantee >= 2 independent (i, j) blocks so the
    # second core isn't idle.  Costs only one extra grid step on 1-TC chips.
    if (pad_B // tm) * (pad_N // tn_eff) < 2:
        for cand in (tn_eff // 2, 128):
            if (cand >= 128 and cand % 128 == 0
                    and pad_N % cand == 0 and pad_N // cand >= 2):
                tn_eff = cand
                break

    # ---- VMEM budget, per generation (v7x: 64 MiB physical; v5e/v6e: 128 MiB).
    try:
        phys_vmem = int(pltpu.get_tpu_info().vmem_capacity_bytes)
    except Exception:
        phys_vmem = 64 * 1024 * 1024        # conservative (v7x-sized) fallback
    budget = phys_vmem // 3

    def footprint(tm_, tn_, tk_):
        return (
            2 * tm_ * tk_ * itemsize                            # x (double-buffered)
            + max(2, weight_buffers) * tk_ * tn_ * itemsize     # w
            + 2 * tn_ * 4                                       # bias
            + 2 * tm_ * tn_ * 4                                 # out (double-buffered)
            + tm_ * tn_ * 4                                      # f32 accumulator
        )

    def _shrinkable(t, pad):
        return t > 128 and (t // 2) % 128 == 0 and pad % (t // 2) == 0

    while footprint(tm, tn_eff, tk_eff) > budget and _shrinkable(tk_eff, pad_K):
        tk_eff //= 2
    while footprint(tm, tn_eff, tk_eff) > budget and _shrinkable(tn_eff, pad_N):
        tn_eff //= 2
    while (footprint(tm, tn_eff, tk_eff) > budget and tm > sublane
           and tm % (2 * sublane) == 0 and pad_B % (tm // 2) == 0):
        tm //= 2

    fp = footprint(tm, tn_eff, tk_eff)
    vmem_limit = int(min(0.75 * phys_vmem, 100 * 1024 * 1024,
                         max(32 * 1024 * 1024, 2 * fp)))
    vmem_limit = max(vmem_limit, fp + (4 << 20))

    # ---- Pad x only when actually needed (aligned shapes pass straight through).
    x_c = x.astype(compute_dtype)
    if (pad_B, pad_K) != (B, h_in):
        x_p = jnp.zeros((pad_B, pad_K), compute_dtype).at[:B, :h_in].set(x_c)
    else:
        x_p = x_c

    grid = (pad_B // tm, pad_N // tn_eff, pad_K // tk_eff)

    w_spec_kwargs = {}
    if weight_buffers != 2:
        # Deeper weight pipelining for the weight-streaming (small-B, long-K) regime.
        w_spec_kwargs["pipeline_mode"] = pl.Buffered(weight_buffers)

    flops = 2 * pad_B * pad_K * pad_N
    bytes_accessed = (
        x_p.size * itemsize + w_p.size * itemsize + b_p.size * 4 + pad_B * pad_N * 4
    )

    out = pl.pallas_call(
        _matmul_bias_kernel,
        out_shape=jax.ShapeDtypeStruct((pad_B, pad_N), jnp.float32),
        grid_spec=pltpu.PrefetchScalarGridSpec(
            num_scalar_prefetch=0,
            grid=grid,
            in_specs=[
                pl.BlockSpec((tm, tk_eff), lambda i, j, k: (i, k)),      # x tile
                pl.BlockSpec((tk_eff, tn_eff), lambda i, j, k: (k, j),   # summed W^T
                             **w_spec_kwargs),
                pl.BlockSpec((1, tn_eff), lambda i, j, k: (0, j)),       # summed bias
            ],
            out_specs=pl.BlockSpec((tm, tn_eff), lambda i, j, k: (i, j)),
            scratch_shapes=[pltpu.VMEM((tm, tn_eff), jnp.float32)],
        ),
        compiler_params=pltpu.CompilerParams(
            dimension_semantics=("parallel", "parallel", "arbitrary"),
            vmem_limit_bytes=vmem_limit,
        ),
        cost_estimate=pl.CostEstimate(
            flops=flops, transcendentals=0, bytes_accessed=bytes_accessed
        ),
    )(x_p, w_p, b_p)

    if (pad_B, pad_N) != (B, h_out):
        out = out[:B, :h_out]
    return out


class SumModulesPallas:
    """Pallas TPU equivalent of SumModules([nn.Linear, ...]): y = x @ (Σ W_m)^T + Σ b_m."""

    def __init__(self, w_stack, b_stack, param_dtype=jnp.bfloat16, weight_buffers=2):
        self.w_p, self.b_p, meta = prepare_sum_params(w_stack, b_stack, param_dtype)
        self._fwd = jax.jit(
            functools.partial(_sum_linear_forward, weight_buffers=weight_buffers, **meta)
        )

    def __call__(self, x):
        return self._fwd(x, self.w_p, self.b_p)


if __name__ == "__main__":
    key = jax.random.PRNGKey(0)

    # --- Case 1: modest shape that exercises the Pallas matmul kernel (bf16). ---
    B, H_in, H_out, M = 128, 256, 384, 3
    k1, k2, k3, key = jax.random.split(key, 4)
    x = jax.random.normal(k1, (B, H_in), dtype=jnp.float32)
    w_stack = jax.random.normal(k2, (M, H_out, H_in), dtype=jnp.float32) * 0.1
    b_stack = jax.random.normal(k3, (M, H_out), dtype=jnp.float32) * 0.1

    mod = SumModulesPallas(w_stack, b_stack)              # bf16 params by default
    out = jax.block_until_ready(mod(x))

    w_sum = jnp.sum(w_stack, axis=0)
    b_sum = jnp.sum(b_stack, axis=0)
    ref_f32 = x @ w_sum.T + b_sum                          # exact SumModules reference
    ref_bf16 = jnp.dot(                                    # same-numerics reference
        x.astype(jnp.bfloat16), w_sum.T.astype(jnp.bfloat16),
        preferred_element_type=jnp.float32,
    ) + b_sum
    assert out.shape == ref_f32.shape
    assert jnp.allclose(out, ref_bf16, atol=1e-3, rtol=1e-3), "Pallas path mismatch (bf16 numerics)"
    assert jnp.allclose(out, ref_f32, atol=8e-2, rtol=8e-2), "Pallas path mismatch vs f32 reference"

    # --- Case 2: tiny shape -> small-shape fast path (plain XLA dot), f32 params. ---
    B2, H2_in, H2_out = 4, 32, 32
    k4, k5, k6, key = jax.random.split(key, 4)
    x2 = jax.random.normal(k4, (B2, H2_in), dtype=jnp.float32)
    w2 = jax.random.normal(k5, (M, H2_out, H2_in), dtype=jnp.float32) * 0.1
    b2 = jax.random.normal(k6, (M, H2_out), dtype=jnp.float32) * 0.1

    mod2 = SumModulesPallas(w2, b2, param_dtype=jnp.float32)
    out2 = jax.block_until_ready(mod2(x2))
    ref2 = sum(x2 @ w2[m].T + b2[m] for m in range(M))
    assert out2.shape == ref2.shape
    assert jnp.allclose(out2, ref2, atol=1e-4, rtol=1e-4), "fast-path mismatch"

    print("KERNEL_OK")
</pallas_src>

<mosaic_0001>
module attributes {stable_mosaic.version = 11 : i64} {
  func.func @_matmul_bias_kernel(%arg0: i32, %arg1: i32, %arg2: i32, %arg3: memref<128x256xbf16, #tpu.memory_space<vmem>>, %arg4: memref<256x128xbf16, #tpu.memory_space<vmem>>, %arg5: memref<1x128xf32, #tpu.memory_space<vmem>>, %arg6: memref<128x128xf32, #tpu.memory_space<vmem>>, %arg7: memref<128x128xf32, #tpu.memory_space<vmem>>) attributes {dimension_semantics = [#tpu.dimension_semantics<parallel>, #tpu.dimension_semantics<parallel>, #tpu.dimension_semantics<arbitrary>], iteration_bounds = array<i64: 1, 3, 1>, scalar_prefetch = 0 : i64, scratch_operands = 1 : i64, tpu.core_type = #tpu.core_type<tc>, window_params = [{transform_indices = @transform_0, window_bounds = array<i64: 128, 256>}, {transform_indices = @transform_1, window_bounds = array<i64: 256, 128>}, {transform_indices = @transform_2, window_bounds = array<i64: 1, 128>}, {transform_indices = @transform_3, window_bounds = array<i64: 128, 128>}]} {
    %c0_i32 = arith.constant 0 : i32
    %0 = arith.cmpi eq, %arg2, %c0_i32 : i32
    %1 = arith.extui %0 : i1 to i32
    %c0_i32_0 = arith.constant 0 : i32
    %2 = arith.cmpi ne, %1, %c0_i32_0 : i32
    scf.if %2 {
      %c0_10 = arith.constant 0 : index
      %c0_11 = arith.constant 0 : index
      %12 = vector.load %arg5[%c0_10, %c0_11] : memref<1x128xf32, #tpu.memory_space<vmem>>, vector<1x128xf32>
      %13 = vector.shape_cast %12 : vector<1x128xf32> to vector<1x128xf32>
      %14 = vector.broadcast %13 : vector<1x128xf32> to vector<128x128xf32>
      %c0_12 = arith.constant 0 : index
      %c0_13 = arith.constant 0 : index
      %15 = vector.load %arg7[%c0_12, %c0_13] : memref<128x128xf32, #tpu.memory_space<vmem>>, vector<128x128xf32>
      tpu.vector_store %arg7[%c0_12, %c0_13], %14 {strides = array<i32>} : memref<128x128xf32, #tpu.memory_space<vmem>>, vector<128x128xf32>,
    } else {
    }
    %c0 = arith.constant 0 : index
    %c0_1 = arith.constant 0 : index
    %3 = vector.load %arg7[%c0, %c0_1] : memref<128x128xf32, #tpu.memory_space<vmem>>, vector<128x128xf32>
    %c0_2 = arith.constant 0 : index
    %c0_3 = arith.constant 0 : index
    %4 = vector.load %arg3[%c0_2, %c0_3] : memref<128x256xbf16, #tpu.memory_space<vmem>>, vector<128x256xbf16>
    %c0_4 = arith.constant 0 : index
    %c0_5 = arith.constant 0 : index
    %5 = vector.load %arg4[%c0_4, %c0_5] : memref<256x128xbf16, #tpu.memory_space<vmem>>, vector<256x128xbf16>
    %cst = arith.constant dense<0.000000e+00> : vector<128x128xf32>
    %6 = tpu.matmul %4, %5, %cst {dimension_numbers = #tpu.dot_dimension_numbers<[1], [0], [0], [1], [0, 0, 1, 1], [], []>} : vector<128x256xbf16>, vector<256x128xbf16>, vector<128x128xf32> -> vector<128x128xf32>
    %7 = arith.addf %3, %6 : vector<128x128xf32>
    %c0_6 = arith.constant 0 : index
    %c0_7 = arith.constant 0 : index
    %8 = vector.load %arg7[%c0_6, %c0_7] : memref<128x128xf32, #tpu.memory_space<vmem>>, vector<128x128xf32>
    tpu.vector_store %arg7[%c0_6, %c0_7], %7 {strides = array<i32>} : memref<128x128xf32, #tpu.memory_space<vmem>>, vector<128x128xf32>,
    %c0_i32_8 = arith.constant 0 : i32
    %9 = arith.cmpi eq, %arg2, %c0_i32_8 : i32
    %10 = arith.extui %9 : i1 to i32
    %c0_i32_9 = arith.constant 0 : i32
    %11 = arith.cmpi ne, %10, %c0_i32_9 : i32
    scf.if %11 {
      %c0_10 = arith.constant 0 : index
      %c0_11 = arith.constant 0 : index
      %12 = vector.load %arg7[%c0_10, %c0_11] : memref<128x128xf32, #tpu.memory_space<vmem>>, vector<128x128xf32>
      %c0_12 = arith.constant 0 : index
      %c0_13 = arith.constant 0 : index
      %13 = vector.load %arg6[%c0_12, %c0_13] : memref<128x128xf32, #tpu.memory_space<vmem>>, vector<128x128xf32>
      tpu.vector_store %arg6[%c0_12, %c0_13], %12 {strides = array<i32>} : memref<128x128xf32, #tpu.memory_space<vmem>>, vector<128x128xf32>,
    } else {
    }
    return
  }
  func.func @transform_0(%arg0: i32, %arg1: i32, %arg2: i32) -> (i32, i32) {
    %c0_i32 = arith.constant 0 : i32
    return %arg0, %arg2 : i32, i32
  }
  func.func @transform_1(%arg0: i32, %arg1: i32, %arg2: i32) -> (i32, i32) {
    %c0_i32 = arith.constant 0 : i32
    return %arg2, %arg1 : i32, i32
  }
  func.func @transform_2(%arg0: i32, %arg1: i32, %arg2: i32) -> (i32, i32) {
    %c0_i32 = arith.constant 0 : i32
    %c0_i32_0 = arith.constant 0 : i32
    return %c0_i32, %arg1 : i32, i32
  }
  func.func @transform_3(%arg0: i32, %arg1: i32, %arg2: i32) -> (i32, i32) {
    %c0_i32 = arith.constant 0 : i32
    return %arg0, %arg1 : i32, i32
  }
}

</mosaic_0001>

<llo_original>
// kernel: _sum_linear_forward.1
$region0: #{_sum_linear_forward.1}
  #allocation0 [shape = 'u32[]', space=smem, size = 0x4, offset = 0x4, fixed_abs, tag = 'smem constant byte address 0x4 - core index']
  #allocation1 [shape = 'u32[144,128]{1,0:T(1,128)}', space=vmem, size = 0x12000, scoped, tag = 'internal scratch']
  #allocation2 [shape = 'f32[128,128]{1,0:T(8,128)}', space=vmem, size = 0x10000, scoped, tag = 'scratch operand']
  %s0 = inlined_call_operand.vmem [shape: bf16[128,256], index: 0, kind: input, shape index: {}]
  %s1 = inlined_call_operand.vmem [shape: bf16[256,384], index: 1, kind: input, shape index: {}]
  %s2 = inlined_call_operand.hbm [shape: f32[1,384], index: 2, kind: input, shape index: {}]
  %s3 = inlined_call_operand.hbm [shape: f32[128,384], index: 3, kind: output, shape index: {}]
  %s4 = sld [smem:[#allocation0]]
  $region98: #{_sum_linear_forward.1} parent=0
    _
  %s6 = ssub.s32 1, %s4
  %s7 = scalar_select 0, %s6, %s4
  $region1: #{_sum_linear_forward.1} parent=0
    #allocation3 [shape = 'u8[131072]{0}', space=vmem, size = 0x20000, scoped, tag = 'input window, operand 1']
    #allocation4 [shape = 'u8[1024]{0}', space=vmem, size = 0x400, scoped, tag = 'input window, operand 2']
    #allocation5 [shape = 's32[2]{0}', space=sflag, size = 0x8, scoped, tag = 'scoped memory for _sum_linear_forward.1']
    #allocation6 [shape = 's32[2]{0}', space=sflag, size = 0x8, scoped, tag = 'scoped memory for _sum_linear_forward.1']
    #allocation7 [shape = 'u8[131072]{0}', space=vmem, size = 0x20000, scoped, tag = 'output window, operand 0']
    %8 = vsyncpa [#allocation5], 0
    %s9 = scalar_lea.sflag [#allocation5], 1
    %10 = vsyncpa %s9, 0
    %11 = vsyncpa [#allocation6], 0
    %s12 = scalar_lea.sflag [#allocation6], 1
    %13 = vsyncpa %s12, 0
    loop: start=0, step=1, limit=5
    $region2: #{_sum_linear_forward.1} parent=1 // loop_pre_header
      _
    $region3: #{_sum_linear_forward.1} parent=1 // loop_header
      %s15 = sphi 0, %s19
      %p16 = scmp.ge.s32.totalorder %s15, 5
      %s22 = sphi 0, %s41
      %s23 = sphi 0, %s37
      %s24 = sphi 0, %s33
      %s25 = sphi 0, %s22
      %s26 = sphi 0, %s23
      %s27 = sphi 0, %s24
      %s28 = sphi 0, %s25
      %s29 = sphi 0, %s26
      %s30 = sphi 0, %s27
      %s46 = sphi 0, %s48
      %s49 = sphi 0, %s46
      %s50 = sphi 0, %s49
      %s66 = sphi 0, %s50
      %s74 = sphi 0, %s76
      %s77 = sphi 0, %s74
      %s78 = sphi 0, %s77
      %s94 = sphi 0, %s78
      %s100 = sphi 0, %s102
      %s103 = sphi 0, %s100
      %s104 = sphi 0, %s103
      %s120 = sphi 0, %s104
      %s128 = sphi 0, %s130
      %s131 = sphi 0, %s128
      %s132 = sphi 0, %s131
      %s148 = sphi 0, %s132
    $region4: #{_sum_linear_forward.1} parent=1 // loop_header_branch
      %18 = sbr.rel (%p16) target = $region8
    $region5: #{_sum_linear_forward.1} parent=1 // loop_body
      %s20 = ssub.s32 %s15, 1
      %s21 = ssub.s32 %s15, 2
      %s31 = sadd.s32 1, %s24
      %p32 = scmp.ge.s32.totalorder %s31, 1
      %s33 = scalar_select %p32, 0, %s31
      %s34 = sadd.s32 1, %s23
      %s35 = scalar_select %p32, %s34, %s23
      %p36 = scmp.ge.s32.totalorder %s35, 3
      %s37 = scalar_select %p36, 0, %s35
      %s38 = sadd.s32 1, %s22
      %s39 = scalar_select %p36, %s38, %s22
      %p40 = scmp.ge.s32.totalorder %s39, 1
      %s41 = scalar_select %p40, 0, %s39
      %s42 = ssub.s32 %s22, %s41
      %s43 = ssub.s32 %s24, %s33
      %s44 = sor.u32 %s42, %s43
      %p45 = scmp.eq.s32.totalorder %s44, 0
      %s47 = sadd.s32 %s46, 1
      %s48 = scalar_select %p45, %s46, %s47
      %p51 = pneg %p45
      %p52 = scmp.eq.s32.totalorder %s15, 2
      %p53 = por %p51, %p52
      %p54 = scmp.ne.s32.totalorder %s46, %s49
      %p55 = scmp.eq.s32.totalorder %s15, 0
      %p56 = por %p54, %p55
      %p57 = scmp.ne.s32.totalorder %s46, %s49
      %p58 = scmp.eq.s32.totalorder %s20, 2
      %p59 = por %p57, %p58
      %p60 = scmp.ne.s32.totalorder %s49, %s50
      %p61 = scmp.eq.s32.totalorder %s20, 0
      %p62 = por %p60, %p61
      %p63 = scmp.ne.s32.totalorder %s49, %s50
      %p64 = scmp.eq.s32.totalorder %s21, 2
      %p65 = por %p63, %p64
      %p67 = scmp.ne.s32.totalorder %s50, %s66
      %p68 = scmp.eq.s32.totalorder %s21, 0
      %p69 = por %p67, %p68
      %s70 = ssub.s32 %s24, %s33
      %s71 = ssub.s32 %s23, %s37
      %s72 = sor.u32 %s70, %s71
      %p73 = scmp.eq.s32.totalorder %s72, 0
      %s75 = sadd.s32 %s74, 1
      %s76 = scalar_select %p73, %s74, %s75
      %p79 = pneg %p73
      %p80 = scmp.eq.s32.totalorder %s15, 2
      %p81 = por %p79, %p80
      %p82 = scmp.ne.s32.totalorder %s74, %s77
      %p83 = scmp.eq.s32.totalorder %s15, 0
      %p84 = por %p82, %p83
      %p85 = scmp.ne.s32.totalorder %s74, %s77
      %p86 = scmp.eq.s32.totalorder %s20, 2
      %p87 = por %p85, %p86
      %p88 = scmp.ne.s32.totalorder %s77, %s78
      %p89 = scmp.eq.s32.totalorder %s20, 0
      %p90 = por %p88, %p89
      %p91 = scmp.ne.s32.totalorder %s77, %s78
      %p92 = scmp.eq.s32.totalorder %s21, 2
      %p93 = por %p91, %p92
      %p95 = scmp.ne.s32.totalorder %s78, %s94
      %p96 = scmp.eq.s32.totalorder %s21, 0
      %p97 = por %p95, %p96
      %s98 = ssub.s32 %s23, %s37
      %p99 = scmp.eq.s32.totalorder %s98, 0
      %s101 = sadd.s32 %s100, 1
      %s102 = scalar_select %p99, %s100, %s101
      %p105 = pneg %p99
      %p106 = scmp.eq.s32.totalorder %s15, 2
      %p107 = por %p105, %p106
      %p108 = scmp.ne.s32.totalorder %s100, %s103
      %p109 = scmp.eq.s32.totalorder %s15, 0
      %p110 = por %p108, %p109
      %p111 = scmp.ne.s32.totalorder %s100, %s103
      %p112 = scmp.eq.s32.totalorder %s20, 2
      %p113 = por %p111, %p112
      %p114 = scmp.ne.s32.totalorder %s103, %s104
      %p115 = scmp.eq.s32.totalorder %s20, 0
      %p116 = por %p114, %p115
      %p117 = scmp.ne.s32.totalorder %s103, %s104
      %p118 = scmp.eq.s32.totalorder %s21, 2
      %p119 = por %p117, %p118
      %p121 = scmp.ne.s32.totalorder %s104, %s120
      %p122 = scmp.eq.s32.totalorder %s21, 0
      %p123 = por %p121, %p122
      %s124 = ssub.s32 %s22, %s41
      %s125 = ssub.s32 %s23, %s37
      %s126 = sor.u32 %s124, %s125
      %p127 = scmp.eq.s32.totalorder %s126, 0
      %s129 = sadd.s32 %s128, 1
      %s130 = scalar_select %p127, %s128, %s129
      %p133 = pneg %p127
      %p134 = scmp.eq.s32.totalorder %s15, 2
      %p135 = por %p133, %p134
      %p136 = scmp.ne.s32.totalorder %s128, %s131
      %p137 = scmp.eq.s32.totalorder %s15, 0
      %p138 = por %p136, %p137
      %p139 = scmp.ne.s32.totalorder %s128, %s131
      %p140 = scmp.eq.s32.totalorder %s20, 2
      %p141 = por %p139, %p140
      %p142 = scmp.ne.s32.totalorder %s131, %s132
      %p143 = scmp.eq.s32.totalorder %s20, 0
      %p144 = por %p142, %p143
      %p145 = scmp.ne.s32.totalorder %s131, %s132
      %p146 = scmp.eq.s32.totalorder %s21, 2
      %p147 = por %p145, %p146
      %p149 = scmp.ne.s32.totalorder %s132, %s148
      %p150 = scmp.eq.s32.totalorder %s21, 0
      %p151 = por %p149, %p150
      %p152 = scmp.le.s32.totalorder 1, %s15
      %p153 = scmp.lt.s32.totalorder %s15, 4
      %p154 = pnand %p152, %p153
      %p155 = pneg %p154
      // Predicated region
      $region9: #{_sum_linear_forward.1} parent=5 // pred_check
        _
      $region10: #{_sum_linear_forward.1} parent=5 // pred_check_branch
        %157 = sbr.rel (%p154) target = $region12
      $region11: #{_sum_linear_forward.1} parent=5 // pred_region
        %s158 = ssub.s32 %s15, 1
        // Predicated region
        $region13: #{_sum_linear_forward.1} parent=11 // pred_check
          %p159 = pneg %p62
        $region14: #{_sum_linear_forward.1} parent=11 // pred_check_branch
          %161 = sbr.rel (%p159) target = $region16
        $region15: #{_sum_linear_forward.1} parent=11 // pred_region
          %s162 = smul.u32 16, %s25
          %s163 = smul.u32 2, %s27
          %p164 = scmp.lt.s32.totalorder %s162, 15
          %s165 = scalar_select %p164, %s162, 15
          %p166 = scmp.lt.s32.totalorder %s163, 1
          %s167 = scalar_select %p166, %s163, 1
          %s168 = smul.addr %s165, 2
          %s169 = sadd.s32 %s167, %s168
          %s170 = smul.addr %s169, 4
          %s171 = scalar_lea.vmem %s0, %s170
          %s172 = smul.u32 16, %s25
          %s173 = smul.u32 2, %s27
        $region16: #{_sum_linear_forward.1} parent=11 // pred_fallthru
          _
      $region12: #{_sum_linear_forward.1} parent=5 // pred_fallthru
        _
      %p174 = scmp.lt.s32.totalorder %s15, 3
      // Predicated region
      $region17: #{_sum_linear_forward.1} parent=5 // pred_check
        %p175 = pneg %p174
      $region18: #{_sum_linear_forward.1} parent=5 // pred_check_branch
        %177 = sbr.rel (%p175) target = $region20
      $region19: #{_sum_linear_forward.1} parent=5 // pred_region
        // Predicated region
        $region21: #{_sum_linear_forward.1} parent=19 // pred_check
          %p178 = pneg %p84
        $region22: #{_sum_linear_forward.1} parent=19 // pred_check_branch
          %180 = sbr.rel (%p178) target = $region24
        $region23: #{_sum_linear_forward.1} parent=19 // pred_region
          %s181 = sand.u32 %s74, 1
          %s182 = sand.u32 %s74, 1
          %s183 = smul.addr %s182, 128
          %s184 = scalar_lea.vmem [#allocation3], %s183
          %s185 = smul.u32 32, %s24
          %s186 = smul.addr %s185, 3
          %s187 = sadd.s32 %s23, %s186
          %s188 = smul.addr %s187, 4
          %s189 = scalar_lea.vmem %s1, %s188
          // Predicated region
          $region25: #{_sum_linear_forward.1} parent=23 // pred_check
            _
          $region26: #{_sum_linear_forward.1} parent=23 // pred_check_branch
            %191 = sbr.rel (0) target = $region28
          $region27: #{_sum_linear_forward.1} parent=23 // pred_region
            // Predicated region
            $region29: #{_sum_linear_forward.1} parent=27 // pred_check
              _
            $region30: #{_sum_linear_forward.1} parent=27 // pred_check_branch
              %193 = sbr.rel target = $region32
            $region31: #{_sum_linear_forward.1} parent=27 // pred_region
              // Predicated region
              $region44: #{_sum_linear_forward.1} parent=31 // pred_check
                _
              $region45: #{_sum_linear_forward.1} parent=31 // pred_check_branch
                %271 = sbr.rel (0) target = $region47
              $region46: #{_sum_linear_forward.1} parent=31 // pred_region
                loop: start=0, step=1, limit=1
                $region48: #{_sum_linear_forward.1} parent=46 // loop_pre_header
                  _
                $region49: #{_sum_linear_forward.1} parent=46 // loop_header
                  %s273 = sphi 0, %s277
                  %p274 = scmp.ge.s32.totalorder %s273, 1
                  %s278 = sphi %s189, %s189
                  %s279 = sphi %s184, %s184
                $region50: #{_sum_linear_forward.1} parent=46 // loop_header_branch
                  %276 = sbr.rel (%p274) target = $region54
                $region51: #{_sum_linear_forward.1} parent=46 // loop_body
                  _
                $region52: #{_sum_linear_forward.1} parent=46 // loop_footer
                  %s277 = sadd.s32 1, %s273
                $region53: #{_sum_linear_forward.1} parent=46 // loop_footer_branch
                  %272 = sbr.rel target = $region49
                $region54: #{_sum_linear_forward.1} parent=46 // loop_exit
                  _
                %s281 = ssub.s32 16, 1
                loop: start=0, step=1, limit=1
                $region55: #{_sum_linear_forward.1} parent=46 // loop_pre_header
                  _
                $region56: #{_sum_linear_forward.1} parent=46 // loop_header
                  %s283 = sphi 0, %s287
                  %p284 = scmp.ge.s32.totalorder %s283, 1
                  %s288 = sphi %s189, %s189
                  %s289 = sphi %s184, %s184
                $region57: #{_sum_linear_forward.1} parent=46 // loop_header_branch
                  %286 = sbr.rel (%p284) target = $region61
                $region58: #{_sum_linear_forward.1} parent=46 // loop_body
                  %v290 = vld [vmem:[%s288] sm:%s281]
                  %291 = vst [vmem:[%s289] sm:%s281] %v290
                  %v292 = vld [vmem:[%s288 + $0xc] sm:%s281]
                  %293 = vst [vmem:[%s289 + $0x4] sm:%s281] %v292
                  %v294 = vld [vmem:[%s288 + $0x18] sm:%s281]
                  %295 = vst [vmem:[%s289 + $0x8] sm:%s281] %v294
                  %v296 = vld [vmem:[%s288 + $0x24] sm:%s281]
                  %297 = vst [vmem:[%s289 + $0xc] sm:%s281] %v296
                  %v298 = vld [vmem:[%s288 + $0x30] sm:%s281]
                  %299 = vst [vmem:[%s289 + $0x10] sm:%s281] %v298
                  %v300 = vld [vmem:[%s288 + $0x3c] sm:%s281]
                  %301 = vst [vmem:[%s289 + $0x14] sm:%s281] %v300
                  %v302 = vld [vmem:[%s288 + $0x48] sm:%s281]
                  %303 = vst [vmem:[%s289 + $0x18] sm:%s281] %v302
                  %v304 = vld [vmem:[%s288 + $0x54] sm:%s281]
                  %305 = vst [vmem:[%s289 + $0x1c] sm:%s281] %v304
                  %v306 = vld [vmem:[%s288 + $0x60] sm:%s281]
                  %307 = vst [vmem:[%s289 + $0x20] sm:%s281] %v306
                  %v308 = vld [vmem:[%s288 + $0x6c] sm:%s281]
                  %309 = vst [vmem:[%s289 + $0x24] sm:%s281] %v308
                  %v310 = vld [vmem:[%s288 + $0x78] sm:%s281]
                  %311 = vst [vmem:[%s289 + $0x28] sm:%s281] %v310
                  %v312 = vld [vmem:[%s288 + $0x84] sm:%s281]
                  %313 = vst [vmem:[%s289 + $0x2c] sm:%s281] %v312
                  %v314 = vld [vmem:[%s288 + $0x90] sm:%s281]
                  %315 = vst [vmem:[%s289 + $0x30] sm:%s281] %v314
                  %v316 = vld [vmem:[%s288 + $0x9c] sm:%s281]
                  %317 = vst [vmem:[%s289 + $0x34] sm:%s281] %v316
                  %v318 = vld [vmem:[%s288 + $0xa8] sm:%s281]
                  %319 = vst [vmem:[%s289 + $0x38] sm:%s281] %v318
                  %v320 = vld [vmem:[%s288 + $0xb4] sm:%s281]
                  %321 = vst [vmem:[%s289 + $0x3c] sm:%s281] %v320
                  %v322 = vld [vmem:[%s288 + $0xc0] sm:%s281]
                  %323 = vst [vmem:[%s289 + $0x40] sm:%s281] %v322
                  %v324 = vld [vmem:[%s288 + $0xcc] sm:%s281]
                  %325 = vst [vmem:[%s289 + $0x44] sm:%s281] %v324
                  %v326 = vld [vmem:[%s288 + $0xd8] sm:%s281]
                  %327 = vst [vmem:[%s289 + $0x48] sm:%s281] %v326
                  %v328 = vld [vmem:[%s288 + $0xe4] sm:%s281]
                  %329 = vst [vmem:[%s289 + $0x4c] sm:%s281] %v328
                  %v330 = vld [vmem:[%s288 + $0xf0] sm:%s281]
                  %331 = vst [vmem:[%s289 + $0x50] sm:%s281] %v330
                  %v332 = vld [vmem:[%s288 + $0xfc] sm:%s281]
                  %333 = vst [vmem:[%s289 + $0x54] sm:%s281] %v332
                  %v334 = vld [vmem:[%s288 + $0x108] sm:%s281]
                  %335 = vst [vmem:[%s289 + $0x58] sm:%s281] %v334
                  %v336 = vld [vmem:[%s288 + $0x114] sm:%s281]
                  %337 = vst [vmem:[%s289 + $0x5c] sm:%s281] %v336
                  %v338 = vld [vmem:[%s288 + $0x120] sm:%s281]
                  %339 = vst [vmem:[%s289 + $0x60] sm:%s281] %v338
                  %v340 = vld [vmem:[%s288 + $0x12c] sm:%s281]
                  %341 = vst [vmem:[%s289 + $0x64] sm:%s281] %v340
                  %v342 = vld [vmem:[%s288 + $0x138] sm:%s281]
                  %343 = vst [vmem:[%s289 + $0x68] sm:%s281] %v342
                  %v344 = vld [vmem:[%s288 + $0x144] sm:%s281]
                  %345 = vst [vmem:[%s289 + $0x6c] sm:%s281] %v344
                  %v346 = vld [vmem:[%s288 + $0x150] sm:%s281]
                  %347 = vst [vmem:[%s289 + $0x70] sm:%s281] %v346
                  %v348 = vld [vmem:[%s288 + $0x15c] sm:%s281]
                  %349 = vst [vmem:[%s289 + $0x74] sm:%s281] %v348
                  %v350 = vld [vmem:[%s288 + $0x168] sm:%s281]
                  %351 = vst [vmem:[%s289 + $0x78] sm:%s281] %v350
                  %v352 = vld [vmem:[%s288 + $0x174] sm:%s281]
                  %353 = vst [vmem:[%s289 + $0x7c] sm:%s281] %v352
                $region59: #{_sum_linear_forward.1} parent=46 // loop_footer
                  %s287 = sadd.s32 1, %s283
                $region60: #{_sum_linear_forward.1} parent=46 // loop_footer_branch
                  %282 = sbr.rel target = $region56
                $region61: #{_sum_linear_forward.1} parent=46 // loop_exit
                  _
              $region47: #{_sum_linear_forward.1} parent=31 // pred_fallthru
                _
            $region32: #{_sum_linear_forward.1} parent=27 // pred_fallthru
              _
            // Predicated region
            $region33: #{_sum_linear_forward.1} parent=27 // pred_check
              _
            $region34: #{_sum_linear_forward.1} parent=27 // pred_check_branch
              %195 = sbr.rel (0) target = $region36
            $region35: #{_sum_linear_forward.1} parent=27 // pred_region
              %s197 = ssub.s32 16, 1
              loop: start=0, step=1, limit=1
              $region37: #{_sum_linear_forward.1} parent=35 // loop_pre_header
                _
              $region38: #{_sum_linear_forward.1} parent=35 // loop_header
                %s199 = sphi 0, %s203
                %p200 = scmp.ge.s32.totalorder %s199, 1
                %s204 = sphi %s189, %s189
                %s205 = sphi %s184, %s184
              $region39: #{_sum_linear_forward.1} parent=35 // loop_header_branch
                %202 = sbr.rel (%p200) target = $region43
              $region40: #{_sum_linear_forward.1} parent=35 // loop_body
                %v206 = vld [vmem:[%s204] sm:%s197]
                %207 = vst [vmem:[%s205] sm:%s197] %v206
                %v208 = vld [vmem:[%s204 + $0xc] sm:%s197]
                %209 = vst [vmem:[%s205 + $0x4] sm:%s197] %v208
                %v210 = vld [vmem:[%s204 + $0x18] sm:%s197]
                %211 = vst [vmem:[%s205 + $0x8] sm:%s197] %v210
                %v212 = vld [vmem:[%s204 + $0x24] sm:%s197]
                %213 = vst [vmem:[%s205 + $0xc] sm:%s197] %v212
                %v214 = vld [vmem:[%s204 + $0x30] sm:%s197]
                %215 = vst [vmem:[%s205 + $0x10] sm:%s197] %v214
                %v216 = vld [vmem:[%s204 + $0x3c] sm:%s197]
                %217 = vst [vmem:[%s205 + $0x14] sm:%s197] %v216
                %v218 = vld [vmem:[%s204 + $0x48] sm:%s197]
                %219 = vst [vmem:[%s205 + $0x18] sm:%s197] %v218
                %v220 = vld [vmem:[%s204 + $0x54] sm:%s197]
                %221 = vst [vmem:[%s205 + $0x1c] sm:%s197] %v220
                %v222 = vld [vmem:[%s204 + $0x60] sm:%s197]
                %223 = vst [vmem:[%s205 + $0x20] sm:%s197] %v222
                %v224 = vld [vmem:[%s204 + $0x6c] sm:%s197]
                %225 = vst [vmem:[%s205 + $0x24] sm:%s197] %v224
                %v226 = vld [vmem:[%s204 + $0x78] sm:%s197]
                %227 = vst [vmem:[%s205 + $0x28] sm:%s197] %v226
                %v228 = vld [vmem:[%s204 + $0x84] sm:%s197]
                %229 = vst [vmem:[%s205 + $0x2c] sm:%s197] %v228
                %v230 = vld [vmem:[%s204 + $0x90] sm:%s197]
                %231 = vst [vmem:[%s205 + $0x30] sm:%s197] %v230
                %v232 = vld [vmem:[%s204 + $0x9c] sm:%s197]
                %233 = vst [vmem:[%s205 + $0x34] sm:%s197] %v232
                %v234 = vld [vmem:[%s204 + $0xa8] sm:%s197]
                %235 = vst [vmem:[%s205 + $0x38] sm:%s197] %v234
                %v236 = vld [vmem:[%s204 + $0xb4] sm:%s197]
                %237 = vst [vmem:[%s205 + $0x3c] sm:%s197] %v236
                %v238 = vld [vmem:[%s204 + $0xc0] sm:%s197]
                %239 = vst [vmem:[%s205 + $0x40] sm:%s197] %v238
                %v240 = vld [vmem:[%s204 + $0xcc] sm:%s197]
                %241 = vst [vmem:[%s205 + $0x44] sm:%s197] %v240
                %v242 = vld [vmem:[%s204 + $0xd8] sm:%s197]
                %243 = vst [vmem:[%s205 + $0x48] sm:%s197] %v242
                %v244 = vld [vmem:[%s204 + $0xe4] sm:%s197]
                %245 = vst [vmem:[%s205 + $0x4c] sm:%s197] %v244
                %v246 = vld [vmem:[%s204 + $0xf0] sm:%s197]
                %247 = vst [vmem:[%s205 + $0x50] sm:%s197] %v246
                %v248 = vld [vmem:[%s204 + $0xfc] sm:%s197]
                %249 = vst [vmem:[%s205 + $0x54] sm:%s197] %v248
                %v250 = vld [vmem:[%s204 + $0x108] sm:%s197]
                %251 = vst [vmem:[%s205 + $0x58] sm:%s197] %v250
                %v252 = vld [vmem:[%s204 + $0x114] sm:%s197]
                %253 = vst [vmem:[%s205 + $0x5c] sm:%s197] %v252
                %v254 = vld [vmem:[%s204 + $0x120] sm:%s197]
                %255 = vst [vmem:[%s205 + $0x60] sm:%s197] %v254
                %v256 = vld [vmem:[%s204 + $0x12c] sm:%s197]
                %257 = vst [vmem:[%s205 + $0x64] sm:%s197] %v256
                %v258 = vld [vmem:[%s204 + $0x138] sm:%s197]
                %259 = vst [vmem:[%s205 + $0x68] sm:%s197] %v258
                %v260 = vld [vmem:[%s204 + $0x144] sm:%s197]
                %261 = vst [vmem:[%s205 + $0x6c] sm:%s197] %v260
                %v262 = vld [vmem:[%s204 + $0x150] sm:%s197]
                %263 = vst [vmem:[%s205 + $0x70] sm:%s197] %v262
                %v264 = vld [vmem:[%s204 + $0x15c] sm:%s197]
                %265 = vst [vmem:[%s205 + $0x74] sm:%s197] %v264
                %v266 = vld [vmem:[%s204 + $0x168] sm:%s197]
                %267 = vst [vmem:[%s205 + $0x78] sm:%s197] %v266
                %v268 = vld [vmem:[%s204 + $0x174] sm:%s197]
                %269 = vst [vmem:[%s205 + $0x7c] sm:%s197] %v268
              $region41: #{_sum_linear_forward.1} parent=35 // loop_footer
                %s203 = sadd.s32 1, %s199
              $region42: #{_sum_linear_forward.1} parent=35 // loop_footer_branch
                %198 = sbr.rel target = $region38
              $region43: #{_sum_linear_forward.1} parent=35 // loop_exit
                _
            $region36: #{_sum_linear_forward.1} parent=27 // pred_fallthru
              _
          $region28: #{_sum_linear_forward.1} parent=23 // pred_fallthru
            _
          %354 = vnop
        $region24: #{_sum_linear_forward.1} parent=19 // pred_fallthru
          _
        // Predicated region
        $region62: #{_sum_linear_forward.1} parent=19 // pred_check
          %p355 = pneg %p110
        $region63: #{_sum_linear_forward.1} parent=19 // pred_check_branch
          %357 = sbr.rel (%p355) target = $region65
        $region64: #{_sum_linear_forward.1} parent=19 // pred_region
          %s358 = sand.u32 %s100, 1
          %s359 = scalar_lea.sflag [#allocation5], %s358
          %s360 = sand.u32 %s100, 1
          %s361 = scalar_lea.vmem [#allocation4], %s360
          %s363 = ssub.s32 16, 16
          %364 = vsyncadd %s359, %s363
          %s365 = smul.addr %s23, 16
          %s366 = scalar_lea.hbm %s2, %s365
          %s368 = sshll.u32 %s361, 4
          %s369 = int_to_ptr.vmem [resolvable:$true] %s368
          %371 = dma.hbm_to_vmem [thread:$0]  %s366, 16, %s369, %s359
        $region65: #{_sum_linear_forward.1} parent=19 // pred_fallthru
          _
      $region20: #{_sum_linear_forward.1} parent=5 // pred_fallthru
        _
      %p372 = scmp.le.s32.totalorder 1, %s15
      %p373 = scmp.lt.s32.totalorder %s15, 4
      %p374 = pnand %p372, %p373
      %p375 = pneg %p374
      // Predicated region
      $region66: #{_sum_linear_forward.1} parent=5 // pred_check
        _
      $region67: #{_sum_linear_forward.1} parent=5 // pred_check_branch
        %377 = sbr.rel (%p374) target = $region69
      $region68: #{_sum_linear_forward.1} parent=5 // pred_region
        %s378 = ssub.s32 %s15, 1
        %s379 = sand.u32 %s77, 1
        %s380 = sand.u32 %s77, 1
        %s381 = smul.addr %s380, 128
        %s382 = scalar_lea.vmem [#allocation3], %s381
        // Predicated region
        $region70: #{_sum_linear_forward.1} parent=68 // pred_check
          %p383 = pneg %p90
        $region71: #{_sum_linear_forward.1} parent=68 // pred_check_branch
          %385 = sbr.rel (%p383) target = $region73
        $region72: #{_sum_linear_forward.1} parent=68 // pred_region
          _
        $region73: #{_sum_linear_forward.1} parent=68 // pred_fallthru
          _
        %s386 = sand.u32 %s103, 1
        %s387 = scalar_lea.sflag [#allocation5], %s386
        %s388 = sand.u32 %s103, 1
        %s389 = scalar_lea.vmem [#allocation4], %s388
        // Predicated region
        $region74: #{_sum_linear_forward.1} parent=68 // pred_check
          %p390 = pneg %p116
        $region75: #{_sum_linear_forward.1} parent=68 // pred_check_branch
          %392 = sbr.rel (%p390) target = $region77
        $region76: #{_sum_linear_forward.1} parent=68 // pred_region
          %393 = dma.done %s387, 16
        $region77: #{_sum_linear_forward.1} parent=68 // pred_fallthru
          _
        %s394 = smul.u32 16, %s25
        %s395 = smul.u32 2, %s27
        %p396 = scmp.lt.s32.totalorder %s394, 15
        %s397 = scalar_select %p396, %s394, 15
        %p398 = scmp.lt.s32.totalorder %s395, 1
        %s399 = scalar_select %p398, %s395, 1
        %s400 = smul.addr %s397, 2
        %s401 = sadd.s32 %s399, %s400
        %s402 = smul.addr %s401, 4
        %s403 = scalar_lea.vmem %s0, %s402
        %p404 = pneg %p62
        %p405 = pneg %p59
        %s406 = sand.u32 %s77, 1
        %s407 = sand.u32 %s77, 1
        %s408 = smul.addr %s407, 128
        %s409 = scalar_lea.vmem [#allocation3], %s408
        %p410 = pneg %p90
        %p411 = pneg %p87
        %s412 = sand.u32 %s103, 1
        %s413 = scalar_lea.sflag [#allocation5], %s412
        %s414 = sand.u32 %s103, 1
        %s415 = scalar_lea.vmem [#allocation4], %s414
        %p416 = pneg %p116
        %p417 = pneg %p113
        %p418 = pneg %p144
        %p419 = pneg %p141
        %s420 = sand.u32 %s131, 1
        %s421 = scalar_lea.sflag [#allocation6], %s420
        %s422 = sand.u32 %s131, 1
        %s423 = smul.addr %s422, 128
        %s424 = scalar_lea.vmem [#allocation7], %s423
        %s425 = smul.u32 16, %s25
        %s426 = smul.u32 2, %s27
        %p427 = scmp.lt.s32.totalorder %s425, 15
        %s428 = scalar_select %p427, %s425, 15
        %p429 = scmp.lt.s32.totalorder %s426, 1
        %s430 = scalar_select %p429, %s426, 1
        %s431 = smul.addr %s428, 2
        %s432 = sadd.s32 %s430, %s431
        %s433 = smul.addr %s432, 4
        %s434 = scalar_lea.vmem %s0, %s433
        %s435 = smul.u32 16, %s25
        %s436 = smul.u32 2, %s27
        %s437 = smul.u32 32, %s27
        %s438 = smul.u32 16, %s25
        %p440 = scmp.eq.s32.totalorder %s27, 0
        // Predicated region
        $region78: #{_sum_linear_forward.1} parent=68 // pred_check
          %p441 = pneg %p440
        $region79: #{_sum_linear_forward.1} parent=68 // pred_check_branch
          %443 = sbr.rel (%p441) target = $region81
        $region80: #{_sum_linear_forward.1} parent=68 // pred_region
          %v444 = vld [vmem:[%s389] sm:$0x1]
          %v446 = vlaneseq
          %v447 = vshrl.u32 %v446, 7
          %v448 = vsub.s32 0, %v447
          %v449 = vrot.slane %v444, %v448
          %451 = vst [vmem:[#allocation2] sm:$0xff] %v449
          %452 = vst [vmem:[#allocation2 + $0x8] sm:$0xff] %v449
          %453 = vst [vmem:[#allocation2 + $0x10] sm:$0xff] %v449
          %454 = vst [vmem:[#allocation2 + $0x18] sm:$0xff] %v449
          %455 = vst [vmem:[#allocation2 + $0x20] sm:$0xff] %v449
          %456 = vst [vmem:[#allocation2 + $0x28] sm:$0xff] %v449
          %457 = vst [vmem:[#allocation2 + $0x30] sm:$0xff] %v449
          %458 = vst [vmem:[#allocation2 + $0x38] sm:$0xff] %v449
          %459 = vst [vmem:[#allocation2 + $0x40] sm:$0xff] %v449
          %460 = vst [vmem:[#allocation2 + $0x48] sm:$0xff] %v449
          %461 = vst [vmem:[#allocation2 + $0x50] sm:$0xff] %v449
          %462 = vst [vmem:[#allocation2 + $0x58] sm:$0xff] %v449
          %463 = vst [vmem:[#allocation2 + $0x60] sm:$0xff] %v449
          %464 = vst [vmem:[#allocation2 + $0x68] sm:$0xff] %v449
          %465 = vst [vmem:[#allocation2 + $0x70] sm:$0xff] %v449
          %466 = vst [vmem:[#allocation2 + $0x78] sm:$0xff] %v449
        $region81: #{_sum_linear_forward.1} parent=68 // pred_fallthru
          _
        %v467 = vld [vmem:[#allocation2] sm:$0xff]
        %v468 = vld [vmem:[#allocation2 + $0x8] sm:$0xff]
        %v469 = vld [vmem:[#allocation2 + $0x10] sm:$0xff]
        %v470 = vld [vmem:[#allocation2 + $0x18] sm:$0xff]
        %v471 = vld [vmem:[#allocation2 + $0x20] sm:$0xff]
        %v472 = vld [vmem:[#allocation2 + $0x28] sm:$0xff]
        %v473 = vld [vmem:[#allocation2 + $0x30] sm:$0xff]
        %v474 = vld [vmem:[#allocation2 + $0x38] sm:$0xff]
        %v475 = vld [vmem:[#allocation2 + $0x40] sm:$0xff]
        %v476 = vld [vmem:[#allocation2 + $0x48] sm:$0xff]
        %v477 = vld [vmem:[#allocation2 + $0x50] sm:$0xff]
        %v478 = vld [vmem:[#allocation2 + $0x58] sm:$0xff]
        %v479 = vld [vmem:[#allocation2 + $0x60] sm:$0xff]
        %v480 = vld [vmem:[#allocation2 + $0x68] sm:$0xff]
        %v481 = vld [vmem:[#allocation2 + $0x70] sm:$0xff]
        %v482 = vld [vmem:[#allocation2 + $0x78] sm:$0xff]
        %v483 = vld [vmem:[%s434] sm:$0xff]
        %v484 = vld [vmem:[%s434 + $0x8] sm:$0xff]
        %v485 = vld [vmem:[%s434 + $0x10] sm:$0xff]
        %v486 = vld [vmem:[%s434 + $0x18] sm:$0xff]
        %v487 = vld [vmem:[%s434 + $0x20] sm:$0xff]
        %v488 = vld [vmem:[%s434 + $0x28] sm:$0xff]
        %v489 = vld [vmem:[%s434 + $0x30] sm:$0xff]
        %v490 = vld [vmem:[%s434 + $0x38] sm:$0xff]
        %v491 = vld [vmem:[%s434 + $0x40] sm:$0xff]
        %v492 = vld [vmem:[%s434 + $0x48] sm:$0xff]
        %v493 = vld [vmem:[%s434 + $0x50] sm:$0xff]
        %v494 = vld [vmem:[%s434 + $0x58] sm:$0xff]
        %v495 = vld [vmem:[%s434 + $0x60] sm:$0xff]
        %v496 = vld [vmem:[%s434 + $0x68] sm:$0xff]
        %v497 = vld [vmem:[%s434 + $0x70] sm:$0xff]
        %v498 = vld [vmem:[%s434 + $0x78] sm:$0xff]
        %v499 = vld [vmem:[%s382] sm:$0xf]
        %v500 = vld [vmem:[%s382 + $0x4] sm:$0xf]
        %v501 = vld [vmem:[%s382 + $0x8] sm:$0xf]
        %v502 = vld [vmem:[%s382 + $0xc] sm:$0xf]
        %v503 = vld [vmem:[%s382 + $0x10] sm:$0xf]
        %v504 = vld [vmem:[%s382 + $0x14] sm:$0xf]
        %v505 = vld [vmem:[%s382 + $0x18] sm:$0xf]
        %v506 = vld [vmem:[%s382 + $0x1c] sm:$0xf]
        %v507 = vld [vmem:[%s382 + $0x20] sm:$0xf]
        %v508 = vld [vmem:[%s382 + $0x24] sm:$0xf]
        %v509 = vld [vmem:[%s382 + $0x28] sm:$0xf]
        %v510 = vld [vmem:[%s382 + $0x2c] sm:$0xf]
        %v511 = vld [vmem:[%s382 + $0x30] sm:$0xf]
        %v512 = vld [vmem:[%s382 + $0x34] sm:$0xf]
        %v513 = vld [vmem:[%s382 + $0x38] sm:$0xf]
        %v514 = vld [vmem:[%s382 + $0x3c] sm:$0xf]
        %v515 = vld [vmem:[%s382 + $0x40] sm:$0xf]
        %v516 = vld [vmem:[%s382 + $0x44] sm:$0xf]
        %v517 = vld [vmem:[%s382 + $0x48] sm:$0xf]
        %v518 = vld [vmem:[%s382 + $0x4c] sm:$0xf]
        %v519 = vld [vmem:[%s382 + $0x50] sm:$0xf]
        %v520 = vld [vmem:[%s382 + $0x54] sm:$0xf]
        %v521 = vld [vmem:[%s382 + $0x58] sm:$0xf]
        %v522 = vld [vmem:[%s382 + $0x5c] sm:$0xf]
        %v523 = vld [vmem:[%s382 + $0x60] sm:$0xf]
        %v524 = vld [vmem:[%s382 + $0x64] sm:$0xf]
        %v525 = vld [vmem:[%s382 + $0x68] sm:$0xf]
        %v526 = vld [vmem:[%s382 + $0x6c] sm:$0xf]
        %v527 = vld [vmem:[%s382 + $0x70] sm:$0xf]
        %v528 = vld [vmem:[%s382 + $0x74] sm:$0xf]
        %v529 = vld [vmem:[%s382 + $0x78] sm:$0xf]
        %v530 = vld [vmem:[%s382 + $0x7c] sm:$0xf]
        %v547 = vunpack.c.l.b16 %v483
        %v548 = vunpack.c.h.b16 %v483
        %v549 = vunpack.c.l.b16 %v484
        %v550 = vunpack.c.h.b16 %v484
        %v551 = vunpack.c.l.b16 %v485
        %v552 = vunpack.c.h.b16 %v485
        %v553 = vunpack.c.l.b16 %v486
        %v554 = vunpack.c.h.b16 %v486
        %v555 = vunpack.c.l.b16 %v487
        %v556 = vunpack.c.h.b16 %v487
        %v557 = vunpack.c.l.b16 %v488
        %v558 = vunpack.c.h.b16 %v488
        %v559 = vunpack.c.l.b16 %v489
        %v560 = vunpack.c.h.b16 %v489
        %v561 = vunpack.c.l.b16 %v490
        %v562 = vunpack.c.h.b16 %v490
        %v563 = vunpack.c.l.b16 %v491
        %v564 = vunpack.c.h.b16 %v491
        %v565 = vunpack.c.l.b16 %v492
        %v566 = vunpack.c.h.b16 %v492
        %v567 = vunpack.c.l.b16 %v493
        %v568 = vunpack.c.h.b16 %v493
        %v569 = vunpack.c.l.b16 %v494
        %v570 = vunpack.c.h.b16 %v494
        %v571 = vunpack.c.l.b16 %v495
        %v572 = vunpack.c.h.b16 %v495
        %v573 = vunpack.c.l.b16 %v496
        %v574 = vunpack.c.h.b16 %v496
        %v575 = vunpack.c.l.b16 %v497
        %v576 = vunpack.c.h.b16 %v497
        %v577 = vunpack.c.l.b16 %v498
        %v578 = vunpack.c.h.b16 %v498
        %v579 = vpack.c.b16 %v549, %v547
        %v580 = vpack.c.b16 %v550, %v548
        %v581 = vpack.c.b16 %v553, %v551
        %v582 = vpack.c.b16 %v554, %v552
        %v583 = vpack.c.b16 %v557, %v555
        %v584 = vpack.c.b16 %v558, %v556
        %v585 = vpack.c.b16 %v561, %v559
        %v586 = vpack.c.b16 %v562, %v560
        %v587 = vpack.c.b16 %v565, %v563
        %v588 = vpack.c.b16 %v566, %v564
        %v589 = vpack.c.b16 %v569, %v567
        %v590 = vpack.c.b16 %v570, %v568
        %v591 = vpack.c.b16 %v573, %v571
        %v592 = vpack.c.b16 %v574, %v572
        %v593 = vpack.c.b16 %v577, %v575
        %v594 = vpack.c.b16 %v578, %v576
        %v643 = vunpack.c.l.b16 %v499
        %v644 = vunpack.c.l.b16 %v500
        %v645 = vunpack.c.l.b16 %v501
        %v646 = vunpack.c.l.b16 %v502
        %v647 = vunpack.c.l.b16 %v503
        %v648 = vunpack.c.l.b16 %v504
        %v649 = vunpack.c.l.b16 %v505
        %v650 = vunpack.c.l.b16 %v506
        %v651 = vunpack.c.l.b16 %v507
        %v652 = vunpack.c.l.b16 %v508
        %v653 = vunpack.c.l.b16 %v509
        %v654 = vunpack.c.l.b16 %v510
        %v655 = vunpack.c.l.b16 %v511
        %v656 = vunpack.c.l.b16 %v512
        %v657 = vunpack.c.l.b16 %v513
        %v658 = vunpack.c.l.b16 %v514
        %v659 = vunpack.c.l.b16 %v515
        %v660 = vunpack.c.l.b16 %v516
        %v661 = vunpack.c.l.b16 %v517
        %v662 = vunpack.c.l.b16 %v518
        %v663 = vunpack.c.l.b16 %v519
        %v664 = vunpack.c.l.b16 %v520
        %v665 = vunpack.c.l.b16 %v521
        %v666 = vunpack.c.l.b16 %v522
        %v667 = vunpack.c.l.b16 %v523
        %v668 = vunpack.c.l.b16 %v524
        %v669 = vunpack.c.l.b16 %v525
        %v670 = vunpack.c.l.b16 %v526
        %v671 = vunpack.c.l.b16 %v527
        %v672 = vunpack.c.l.b16 %v528
        %v673 = vunpack.c.l.b16 %v529
        %v674 = vunpack.c.l.b16 %v530
        %v675 = vpack.c.b16 %v644, %v643
        %v676 = vpack.c.b16 %v646, %v645
        %v677 = vpack.c.b16 %v648, %v647
        %v678 = vpack.c.b16 %v650, %v649
        %v679 = vpack.c.b16 %v652, %v651
        %v680 = vpack.c.b16 %v654, %v653
        %v681 = vpack.c.b16 %v656, %v655
        %v682 = vpack.c.b16 %v658, %v657
        %v683 = vpack.c.b16 %v660, %v659
        %v684 = vpack.c.b16 %v662, %v661
        %v685 = vpack.c.b16 %v664, %v663
        %v686 = vpack.c.b16 %v666, %v665
        %v687 = vpack.c.b16 %v668, %v667
        %v688 = vpack.c.b16 %v670, %v669
        %v689 = vpack.c.b16 %v672, %v671
        %v690 = vpack.c.b16 %v674, %v673
        %707 = vmatprep.subr.bf16.mxu0 0
        %708 = vmatpush1.bf16.msra.mxu0 %v682
        %709 = vmatprep.subr.bf16.mxu0 0
        %710 = vmatpush1.bf16.msra.mxu0 %v681
        %711 = vmatprep.subr.bf16.mxu0 0
        %712 = vmatpush1.bf16.msra.mxu0 %v680
        %713 = vmatprep.subr.bf16.mxu0 0
        %714 = vmatpush1.bf16.msra.mxu0 %v679
        %715 = vmatprep.subr.bf16.mxu0 0
        %716 = vmatpush1.bf16.msra.mxu0 %v678
        %717 = vmatprep.subr.bf16.mxu0 0
        %718 = vmatpush1.bf16.msra.mxu0 %v677
        %719 = vmatprep.subr.bf16.mxu0 0
        %720 = vmatpush1.bf16.msra.mxu0 %v676
        %721 = vmatprep.subr.bf16.mxu0 0
        %722 = vmatpush1.bf16.msra.mxu0 %v675
        %723 = vmatprep.subr.bf16.mxu0 0
        %724 = vmatpush2.bf16.msra.mxu0 %v690
        %725 = vmatprep.subr.bf16.mxu0 0
        %726 = vmatpush2.bf16.msra.mxu0 %v689
        %727 = vmatprep.subr.bf16.mxu0 0
        %728 = vmatpush2.bf16.msra.mxu0 %v688
        %729 = vmatprep.subr.bf16.mxu0 0
        %730 = vmatpush2.bf16.msra.mxu0 %v687
        %731 = vmatprep.subr.bf16.mxu0 0
        %732 = vmatpush2.bf16.msra.mxu0 %v686
        %733 = vmatprep.subr.bf16.mxu0 0
        %734 = vmatpush2.bf16.msra.mxu0 %v685
        %735 = vmatprep.subr.bf16.mxu0 0
        %736 = vmatpush2.bf16.msra.mxu0 %v684
        %737 = vmatprep.subr.bf16.mxu0 0
        %738 = vmatpush2.bf16.msra.mxu0 %v683
        %739 = vmatprep.mubr.bf16.mxu0 %v580
        %740 = vmatmul.mubr.bf16.gmra.mxu0 %v579
        %v741 = vpop.f32.mrf.mxu0
        %v742 = vadd.f32 0.0, %v741
        %v743 = vpop.f32.mrf.mxu0
        %v744 = vpop.f32.mrf.mxu0
        %v745 = vadd.f32 0.0, %v744
        %v746 = vpop.f32.mrf.mxu0
        %747 = vmatprep.mubr.bf16.mxu0 %v582
        %748 = vmatmul.mubr.bf16.gmra.mxu0 %v581
        %v749 = vpop.f32.mrf.mxu0
        %v750 = vadd.f32 0.0, %v749
        %v751 = vpop.f32.mrf.mxu0
        %v752 = vpop.f32.mrf.mxu0
        %v753 = vadd.f32 0.0, %v752
        %v754 = vpop.f32.mrf.mxu0
        %755 = vmatprep.mubr.bf16.mxu0 %v584
        %756 = vmatmul.mubr.bf16.gmra.mxu0 %v583
        %v757 = vpop.f32.mrf.mxu0
        %v758 = vadd.f32 0.0, %v757
        %v759 = vpop.f32.mrf.mxu0
        %v760 = vpop.f32.mrf.mxu0
        %v761 = vadd.f32 0.0, %v760
        %v762 = vpop.f32.mrf.mxu0
        %763 = vmatprep.mubr.bf16.mxu0 %v586
        %764 = vmatmul.mubr.bf16.gmra.mxu0 %v585
        %v765 = vpop.f32.mrf.mxu0
        %v766 = vadd.f32 0.0, %v765
        %v767 = vpop.f32.mrf.mxu0
        %v768 = vpop.f32.mrf.mxu0
        %v769 = vadd.f32 0.0, %v768
        %v770 = vpop.f32.mrf.mxu0
        %771 = vmatprep.mubr.bf16.mxu0 %v588
        %772 = vmatmul.mubr.bf16.gmra.mxu0 %v587
        %v773 = vpop.f32.mrf.mxu0
        %v774 = vadd.f32 0.0, %v773
        %v775 = vpop.f32.mrf.mxu0
        %v776 = vpop.f32.mrf.mxu0
        %v777 = vadd.f32 0.0, %v776
        %v778 = vpop.f32.mrf.mxu0
        %779 = vmatprep.mubr.bf16.mxu0 %v590
        %780 = vmatmul.mubr.bf16.gmra.mxu0 %v589
        %v781 = vpop.f32.mrf.mxu0
        %v782 = vadd.f32 0.0, %v781
        %v783 = vpop.f32.mrf.mxu0
        %v784 = vpop.f32.mrf.mxu0
        %v785 = vadd.f32 0.0, %v784
        %v786 = vpop.f32.mrf.mxu0
        %787 = vmatprep.mubr.bf16.mxu0 %v592
        %788 = vmatmul.mubr.bf16.gmra.mxu0 %v591
        %v789 = vpop.f32.mrf.mxu0
        %v790 = vadd.f32 0.0, %v789
        %v791 = vpop.f32.mrf.mxu0
        %v792 = vpop.f32.mrf.mxu0
        %v793 = vadd.f32 0.0, %v792
        %v794 = vpop.f32.mrf.mxu0
        %795 = vmatprep.mubr.bf16.mxu0 %v594
        %796 = vmatmul.mubr.bf16.gmra.mxu0 %v593
        %v797 = vpop.f32.mrf.mxu0
        %v798 = vadd.f32 0.0, %v797
        %v799 = vpop.f32.mrf.mxu0
        %v800 = vpop.f32.mrf.mxu0
        %v801 = vadd.f32 0.0, %v800
        %v802 = vpop.f32.mrf.mxu0
        %803 = vdwg.mxu0
        %v804 = vadd.f32 %v467, %v742
        %v805 = vadd.f32 %v468, %v745
        %v806 = vadd.f32 %v469, %v750
        %v807 = vadd.f32 %v470, %v753
        %v808 = vadd.f32 %v471, %v758
        %v809 = vadd.f32 %v472, %v761
        %v810 = vadd.f32 %v473, %v766
        %v811 = vadd.f32 %v474, %v769
        %v812 = vadd.f32 %v475, %v774
        %v813 = vadd.f32 %v476, %v777
        %v814 = vadd.f32 %v477, %v782
        %v815 = vadd.f32 %v478, %v785
        %v816 = vadd.f32 %v479, %v790
        %v817 = vadd.f32 %v480, %v793
        %v818 = vadd.f32 %v481, %v798
        %v819 = vadd.f32 %v482, %v801
        %820 = vst [vmem:[#allocation2] sm:$0xff] %v804
        %821 = vst [vmem:[#allocation2 + $0x8] sm:$0xff] %v805
        %822 = vst [vmem:[#allocation2 + $0x10] sm:$0xff] %v806
        %823 = vst [vmem:[#allocation2 + $0x18] sm:$0xff] %v807
        %824 = vst [vmem:[#allocation2 + $0x20] sm:$0xff] %v808
        %825 = vst [vmem:[#allocation2 + $0x28] sm:$0xff] %v809
        %826 = vst [vmem:[#allocation2 + $0x30] sm:$0xff] %v810
        %827 = vst [vmem:[#allocation2 + $0x38] sm:$0xff] %v811
        %828 = vst [vmem:[#allocation2 + $0x40] sm:$0xff] %v812
        %829 = vst [vmem:[#allocation2 + $0x48] sm:$0xff] %v813
        %830 = vst [vmem:[#allocation2 + $0x50] sm:$0xff] %v814
        %831 = vst [vmem:[#allocation2 + $0x58] sm:$0xff] %v815
        %832 = vst [vmem:[#allocation2 + $0x60] sm:$0xff] %v816
        %833 = vst [vmem:[#allocation2 + $0x68] sm:$0xff] %v817
        %834 = vst [vmem:[#allocation2 + $0x70] sm:$0xff] %v818
        %835 = vst [vmem:[#allocation2 + $0x78] sm:$0xff] %v819
        // Predicated region
        $region82: #{_sum_linear_forward.1} parent=68 // pred_check
          %p836 = pneg %p440
        $region83: #{_sum_linear_forward.1} parent=68 // pred_check_branch
          %838 = sbr.rel (%p836) target = $region85
        $region84: #{_sum_linear_forward.1} parent=68 // pred_region
          %v839 = vld [vmem:[#allocation2] sm:$0xff]
          %v840 = vld [vmem:[#allocation2 + $0x8] sm:$0xff]
          %v841 = vld [vmem:[#allocation2 + $0x10] sm:$0xff]
          %v842 = vld [vmem:[#allocation2 + $0x18] sm:$0xff]
          %v843 = vld [vmem:[#allocation2 + $0x20] sm:$0xff]
          %v844 = vld [vmem:[#allocation2 + $0x28] sm:$0xff]
          %v845 = vld [vmem:[#allocation2 + $0x30] sm:$0xff]
          %v846 = vld [vmem:[#allocation2 + $0x38] sm:$0xff]
          %v847 = vld [vmem:[#allocation2 + $0x40] sm:$0xff]
          %v848 = vld [vmem:[#allocation2 + $0x48] sm:$0xff]
          %v849 = vld [vmem:[#allocation2 + $0x50] sm:$0xff]
          %v850 = vld [vmem:[#allocation2 + $0x58] sm:$0xff]
          %v851 = vld [vmem:[#allocation2 + $0x60] sm:$0xff]
          %v852 = vld [vmem:[#allocation2 + $0x68] sm:$0xff]
          %v853 = vld [vmem:[#allocation2 + $0x70] sm:$0xff]
          %v854 = vld [vmem:[#allocation2 + $0x78] sm:$0xff]
          %855 = vst [vmem:[%s424] sm:$0xff] %v839
          %856 = vst [vmem:[%s424 + $0x8] sm:$0xff] %v840
          %857 = vst [vmem:[%s424 + $0x10] sm:$0xff] %v841
          %858 = vst [vmem:[%s424 + $0x18] sm:$0xff] %v842
          %859 = vst [vmem:[%s424 + $0x20] sm:$0xff] %v843
          %860 = vst [vmem:[%s424 + $0x28] sm:$0xff] %v844
          %861 = vst [vmem:[%s424 + $0x30] sm:$0xff] %v845
          %862 = vst [vmem:[%s424 + $0x38] sm:$0xff] %v846
          %863 = vst [vmem:[%s424 + $0x40] sm:$0xff] %v847
          %864 = vst [vmem:[%s424 + $0x48] sm:$0xff] %v848
          %865 = vst [vmem:[%s424 + $0x50] sm:$0xff] %v849
          %866 = vst [vmem:[%s424 + $0x58] sm:$0xff] %v850
          %867 = vst [vmem:[%s424 + $0x60] sm:$0xff] %v851
          %868 = vst [vmem:[%s424 + $0x68] sm:$0xff] %v852
          %869 = vst [vmem:[%s424 + $0x70] sm:$0xff] %v853
          %870 = vst [vmem:[%s424 + $0x78] sm:$0xff] %v854
        $region85: #{_sum_linear_forward.1} parent=68 // pred_fallthru
          _
        %s871 = sand.u32 %s131, 1
        %s872 = scalar_lea.sflag [#allocation6], %s871
        %s873 = sand.u32 %s131, 1
        %s874 = smul.addr %s873, 128
        %s875 = scalar_lea.vmem [#allocation7], %s874
        // Predicated region
        $region86: #{_sum_linear_forward.1} parent=68 // pred_check
          %p876 = pneg %p141
        $region87: #{_sum_linear_forward.1} parent=68 // pred_check_branch
          %878 = sbr.rel (%p876) target = $region89
        $region88: #{_sum_linear_forward.1} parent=68 // pred_region
          %s879 = smul.u32 16, %s25
          %s881 = ssub.s32 2048, 2048
          %882 = vsyncadd %s872, %s881
          %s883 = smul.addr %s879, 3
          %s884 = sadd.s32 %s26, %s883
          %s885 = smul.addr %s884, 128
          %s886 = scalar_lea.hbm %s3, %s885
          %s887 = sshll.u32 %s875, 4
          %s888 = int_to_ptr.vmem [resolvable:$true] %s887
          %893 = dma.vmem_to_hbm [thread:$0]  %s888, 2048, %s886, %s872, 128, 384, 8
        $region89: #{_sum_linear_forward.1} parent=68 // pred_fallthru
          _
      $region69: #{_sum_linear_forward.1} parent=5 // pred_fallthru
        _
      %p894 = scmp.le.s32.totalorder 2, %s15
      // Predicated region
      $region90: #{_sum_linear_forward.1} parent=5 // pred_check
        %p895 = pneg %p894
      $region91: #{_sum_linear_forward.1} parent=5 // pred_check_branch
        %897 = sbr.rel (%p895) target = $region93
      $region92: #{_sum_linear_forward.1} parent=5 // pred_region
        %s898 = ssub.s32 %s15, 2
        // Predicated region
        $region94: #{_sum_linear_forward.1} parent=92 // pred_check
          %p899 = pneg %p147
        $region95: #{_sum_linear_forward.1} parent=92 // pred_check_branch
          %901 = sbr.rel (%p899) target = $region97
        $region96: #{_sum_linear_forward.1} parent=92 // pred_region
          %s902 = sand.u32 %s132, 1
          %s903 = scalar_lea.sflag [#allocation6], %s902
          %s904 = sand.u32 %s132, 1
          %s905 = smul.addr %s904, 128
          %s906 = scalar_lea.vmem [#allocation7], %s905
          %907 = dma.done %s903, 2048
        $region97: #{_sum_linear_forward.1} parent=92 // pred_fallthru
          _
      $region93: #{_sum_linear_forward.1} parent=5 // pred_fallthru
        _
    $region6: #{_sum_linear_forward.1} parent=1 // loop_footer
      %s19 = sadd.s32 1, %s15
    $region7: #{_sum_linear_forward.1} parent=1 // loop_footer_branch
      %14 = sbr.rel target = $region3
    $region8: #{_sum_linear_forward.1} parent=1 // loop_exit
      _
    %908 = vsyncpa [#allocation5], 1
    %s909 = scalar_lea.sflag [#allocation5], 1
    %910 = vsyncpa %s909, 1
    %911 = vsyncpa [#allocation6], 1
    %s912 = scalar_lea.sflag [#allocation6], 1
    %913 = vsyncpa %s912, 1

</llo_original>
